<compile_context>
chip_gen: v5e
topology: v5e:2x2
jax: 0.10.0
libtpu: 0.0.40
codegen_flags: <defaults>
</compile_context>

<pallas_src>
import jax
import jax.numpy as jnp
from jax.experimental import pallas as pl
from jax.experimental.pallas import tpu as pltpu


def _round_up(x: int, m: int) -> int:
    return ((x + m - 1) // m) * m


def _clip_kernel(feat_ref, w_ref, b_ref, text_ref, out_ref, img_ref):
    """grid = (batch tiles i, class tiles j); j is the inner ("arbitrary") axis."""
    # Adapter matmul + L2-normalization run ONCE per batch tile (at j == 0);
    # the normalized image features persist in VMEM scratch across the class axis.
    @pl.when(pl.program_id(1) == 0)
    def _():
        img = jnp.dot(feat_ref[...], w_ref[...],
                      preferred_element_type=jnp.float32)      # [tm, Dp_out] f32 accum
        img = img + b_ref[...]                                  # [1, Dp_out] broadcast
        # rsqrt * mul (EUP slot) instead of sqrt + divide (VALU); the eps keeps
        # padded all-zero rows finite (those rows are sliced off in the wrapper
        # and the eps is far below one f32 ulp of any real row's squared norm).
        inv = jax.lax.rsqrt(jnp.sum(img * img, axis=-1, keepdims=True) + 1e-12)
        # Normalization is applied here (once per batch tile over [tm, Dp]) so
        # it is not repeated per class tile; scratch is bf16 when bf16_matmul.
        img_ref[...] = (img * inv).astype(img_ref.dtype)

    # logits tile = normalized image features @ (text / ||text||_0 / T) tile
    out_ref[...] = jnp.dot(img_ref[...], text_ref[...],
                           preferred_element_type=jnp.float32).astype(out_ref.dtype)


def custom_clip_forward(features, adapter_w, adapter_b, text_features,
                        temperature: float = 0.01, *,
                        block_m: int = 256, block_n: int = 512,
                        bf16_matmul: bool = True):
    """Pallas implementation of CustomCLIP.forward (use_group=False path).

    bf16_matmul=True (default): MXU inputs are bf16, accumulation stays f32.
    bf16 rounding gives ~1e-3 relative error, i.e. ~0.1-0.5 absolute on logits
    scaled by 1/temperature=100; pass bf16_matmul=False for bit-tight results.
    """
    B, D = features.shape
    Dw_in, Dw_out = adapter_w.shape
    Dt, C = text_features.shape
    assert Dw_in == D and Dt == Dw_out

    f32 = jnp.float32
    in_dtype = jnp.bfloat16 if bf16_matmul else f32
    in_bytes = 2 if bf16_matmul else 4

    # --- text features are constant per call: normalize over dim=0, fold in
    #     1/temperature, and cast ONCE in the wrapper (no per-step kernel work).
    t = text_features.astype(f32)
    t = t * jax.lax.rsqrt(jnp.sum(t * t, axis=0, keepdims=True))
    t = (t * (1.0 / float(temperature))).astype(in_dtype)

    # --- pad feature / class dims to multiples of 128 (lane-dense matmuls and
    #     unmasked output stores); zero padding provably does not change the
    #     real logits and padded rows/cols are sliced off below.
    Dp_in = _round_up(max(D, 1), 128)
    Dp_out = _round_up(max(Dw_out, 1), 128)
    Cp128 = _round_up(max(C, 1), 128)
    tn = min(_round_up(block_n, 128), Cp128)     # class tile (multiple of 128)
    Cp = _round_up(C, tn)
    n_c = Cp // tn

    # --- batch tiling: balance tm to the batch (no 2x padded-batch work) and
    #     guarantee >= 2 grid steps when B >= 16 so the "parallel" axis can
    #     shard across both TensorCores on v7x and the pipeline has depth.
    steps = pl.cdiv(B, block_m)
    if B >= 16:
        steps = max(steps, 2)
    tm = _round_up(pl.cdiv(B, steps), 8)         # multiple of 8 sublanes
    steps = pl.cdiv(B, tm)
    Bp = steps * tm

    feat_p = jnp.zeros((Bp, Dp_in), in_dtype).at[:B, :D].set(features.astype(in_dtype))
    w_p = jnp.zeros((Dp_in, Dp_out), in_dtype).at[:D, :Dw_out].set(
        adapter_w.astype(in_dtype))
    b_p = jnp.zeros((1, Dp_out), f32).at[:, :Dw_out].set(
        adapter_b.reshape(1, -1).astype(f32))
    t_p = jnp.zeros((Dp_out, Cp), in_dtype).at[:Dt, :C].set(t)

    # --- explicit VMEM budget: streamed tiles are double-buffered, residents
    #     counted conservatively at 2 buffers, plus the img scratch + headroom.
    resident_bytes = 2 * (Dp_in * Dp_out * in_bytes + 8 * Dp_out * 4)
    stream_bytes = 2 * (tm * Dp_in * in_bytes + Dp_out * tn * in_bytes + tm * tn * 4)
    scratch_bytes = tm * Dp_out * in_bytes
    vmem_limit = int(min(resident_bytes + stream_bytes + scratch_bytes + (8 << 20),
                         120 << 20))

    cost = pl.CostEstimate(
        flops=2 * Bp * Dp_in * Dp_out + 2 * Bp * Dp_out * Cp,
        transcendentals=Bp,
        bytes_accessed=(Bp * Dp_in * in_bytes + Dp_in * Dp_out * in_bytes
                        + Dp_out * 4 + Dp_out * Cp * in_bytes + Bp * Cp * 4))

    def build(single_buffer_residents: bool):
        resident_kw = {}
        if single_buffer_residents:
            # W / bias never change block index -> one VMEM buffer is enough.
            resident_kw = dict(pipeline_mode=pl.Buffered(1))
        grid_spec = pltpu.PrefetchScalarGridSpec(
            num_scalar_prefetch=0,
            grid=(steps, n_c),
            in_specs=[
                # streamed batch tile (double-buffered; constant across j)
                pl.BlockSpec((tm, Dp_in), lambda i, j: (i, 0)),
                # resident constants
                pl.BlockSpec((Dp_in, Dp_out), lambda i, j: (0, 0), **resident_kw),
                pl.BlockSpec((1, Dp_out), lambda i, j: (0, 0), **resident_kw),
                # streamed class tile of the pre-scaled text matrix
                pl.BlockSpec((Dp_out, tn), lambda i, j: (0, j)),
            ],
            out_specs=pl.BlockSpec((tm, tn), lambda i, j: (i, j)),
            # normalized image features carried across the class axis
            scratch_shapes=[pltpu.VMEM((tm, Dp_out), in_dtype)],
        )
        return pl.pallas_call(
            _clip_kernel,
            out_shape=jax.ShapeDtypeStruct((Bp, Cp), f32),
            grid_spec=grid_spec,
            compiler_params=pltpu.CompilerParams(
                # batch axis independent -> megacore sharding on v7x;
                # class axis carries the img scratch -> "arbitrary".
                dimension_semantics=("parallel", "arbitrary"),
                vmem_limit_bytes=vmem_limit),
            cost_estimate=cost,
        )

    try:
        out_padded = build(True)(feat_p, w_p, b_p, t_p)
    except Exception:
        # Some JAX versions reject single-buffered residents (pl.Buffered(1));
        # fall back to the default double-buffered pipeline (correct, just
        # uses more VMEM for the resident W / bias).
        out_padded = build(False)(feat_p, w_p, b_p, t_p)

    return out_padded[:B, :C]


def _reference_forward(features, adapter_w, adapter_b, text_features,
                       temperature: float = 0.01):
    img = features @ adapter_w + adapter_b
    img = img / jnp.linalg.norm(img, axis=-1, keepdims=True)
    txt = text_features / jnp.linalg.norm(text_features, axis=0, keepdims=True)
    return img @ txt / temperature


if __name__ == "__main__":
    B, D, C = 24, 32, 200        # batch, feature-dim (hidden), n_cls
    temperature = 0.01

    key = jax.random.PRNGKey(0)
    k_feat, k_w, k_b, k_text = jax.random.split(key, 4)

    features = jax.random.normal(k_feat, (B, D), dtype=jnp.float32)
    adapter_w = jax.random.normal(k_w, (D, D), dtype=jnp.float32) * 0.1
    adapter_b = jax.random.normal(k_b, (D,), dtype=jnp.float32) * 0.1
    text_features = jax.random.normal(k_text, (D, C), dtype=jnp.float32)

    ref = _reference_forward(features, adapter_w, adapter_b, text_features, temperature)

    # 1) exact path (f32 MXU inputs), small blocks to exercise a (3, 2) grid.
    logits_f32 = custom_clip_forward(features, adapter_w, adapter_b, text_features,
                                     temperature, block_m=8, block_n=128,
                                     bf16_matmul=False)
    logits_f32 = jax.block_until_ready(logits_f32)
    assert logits_f32.shape == (B, C)
    assert jnp.allclose(logits_f32, ref, atol=1e-3, rtol=1e-3), "f32 path mismatch"

    # 2) default performance path (bf16 MXU inputs, f32 accumulation).
    #    bf16 rounding of ~1e-3 relative on logits scaled by 1/T=100 -> loose atol.
    logits_bf16 = custom_clip_forward(features, adapter_w, adapter_b, text_features,
                                      temperature)
    logits_bf16 = jax.block_until_ready(logits_bf16)
    assert logits_bf16.shape == (B, C)
    assert jnp.allclose(logits_bf16, ref, atol=1.0, rtol=2e-2), "bf16 path mismatch"

    print("KERNEL_OK")
</pallas_src>

<mosaic_0001>
module attributes {stable_mosaic.version = 11 : i64} {
  func.func @_clip_kernel(%arg0: i32, %arg1: i32, %arg2: memref<8x128xf32, #tpu.memory_space<vmem>>, %arg3: memref<128x128xf32, #tpu.memory_space<vmem>>, %arg4: memref<1x128xf32, #tpu.memory_space<vmem>>, %arg5: memref<128x128xf32, #tpu.memory_space<vmem>>, %arg6: memref<8x128xf32, #tpu.memory_space<vmem>>, %arg7: memref<8x128xf32, #tpu.memory_space<vmem>>) attributes {dimension_semantics = [#tpu.dimension_semantics<parallel>, #tpu.dimension_semantics<arbitrary>], iteration_bounds = array<i64: 3, 2>, scalar_prefetch = 0 : i64, scratch_operands = 1 : i64, tpu.core_type = #tpu.core_type<tc>, window_params = [{transform_indices = @transform_0, window_bounds = array<i64: 8, 128>}, {pipeline_mode = #tpu.pipeline_mode<synchronous>, transform_indices = @transform_1, window_bounds = array<i64: 128, 128>}, {pipeline_mode = #tpu.pipeline_mode<synchronous>, transform_indices = @transform_2, window_bounds = array<i64: 1, 128>}, {transform_indices = @transform_3, window_bounds = array<i64: 128, 128>}, {transform_indices = @transform_4, window_bounds = array<i64: 8, 128>}]} {
    %c0_i32 = arith.constant 0 : i32
    %0 = arith.cmpi eq, %arg1, %c0_i32 : i32
    %1 = arith.extui %0 : i1 to i32
    %c0_i32_0 = arith.constant 0 : i32
    %2 = arith.cmpi ne, %1, %c0_i32_0 : i32
    scf.if %2 {
      %c0_6 = arith.constant 0 : index
      %c0_7 = arith.constant 0 : index
      %7 = vector.load %arg2[%c0_6, %c0_7] : memref<8x128xf32, #tpu.memory_space<vmem>>, vector<8x128xf32>
      %c0_8 = arith.constant 0 : index
      %c0_9 = arith.constant 0 : index
      %8 = vector.load %arg3[%c0_8, %c0_9] : memref<128x128xf32, #tpu.memory_space<vmem>>, vector<128x128xf32>
      %cst_10 = arith.constant dense<0.000000e+00> : vector<8x128xf32>
      %9 = tpu.matmul %7, %8, %cst_10 {dimension_numbers = #tpu.dot_dimension_numbers<[1], [0], [0], [1], [0, 0, 1, 1], [], []>} : vector<8x128xf32>, vector<128x128xf32>, vector<8x128xf32> -> vector<8x128xf32>
      %c0_11 = arith.constant 0 : index
      %c0_12 = arith.constant 0 : index
      %10 = vector.load %arg4[%c0_11, %c0_12] : memref<1x128xf32, #tpu.memory_space<vmem>>, vector<1x128xf32>
      %11 = vector.broadcast %10 : vector<1x128xf32> to vector<8x128xf32>
      %12 = arith.addf %9, %11 : vector<8x128xf32>
      %13 = arith.mulf %12, %12 : vector<8x128xf32>
      %cst_13 = arith.constant dense<0.000000e+00> : vector<8xf32>
      %14 = vector.multi_reduction <add>, %13, %cst_13 [1] : vector<8x128xf32> to vector<8xf32>
      %15 = vector.shape_cast %14 : vector<8xf32> to vector<8x1xf32>
      %cst_14 = arith.constant 9.99999996E-13 : f32
      %16 = vector.broadcast %cst_14 : f32 to vector<8x1xf32>
      %17 = arith.addf %15, %16 : vector<8x1xf32>
      %18 = math.rsqrt %17 : vector<8x1xf32>
      %19 = vector.broadcast %18 : vector<8x1xf32> to vector<8x128xf32>
      %20 = arith.mulf %12, %19 : vector<8x128xf32>
      %c0_15 = arith.constant 0 : index
      %c0_16 = arith.constant 0 : index
      %21 = vector.load %arg7[%c0_15, %c0_16] : memref<8x128xf32, #tpu.memory_space<vmem>>, vector<8x128xf32>
      tpu.vector_store %arg7[%c0_15, %c0_16], %20 {strides = array<i32>} : memref<8x128xf32, #tpu.memory_space<vmem>>, vector<8x128xf32>,
    } else {
    }
    %c0 = arith.constant 0 : index
    %c0_1 = arith.constant 0 : index
    %3 = vector.load %arg7[%c0, %c0_1] : memref<8x128xf32, #tpu.memory_space<vmem>>, vector<8x128xf32>
    %c0_2 = arith.constant 0 : index
    %c0_3 = arith.constant 0 : index
    %4 = vector.load %arg5[%c0_2, %c0_3] : memref<128x128xf32, #tpu.memory_space<vmem>>, vector<128x128xf32>
    %cst = arith.constant dense<0.000000e+00> : vector<8x128xf32>
    %5 = tpu.matmul %3, %4, %cst {dimension_numbers = #tpu.dot_dimension_numbers<[1], [0], [0], [1], [0, 0, 1, 1], [], []>} : vector<8x128xf32>, vector<128x128xf32>, vector<8x128xf32> -> vector<8x128xf32>
    %c0_4 = arith.constant 0 : index
    %c0_5 = arith.constant 0 : index
    %6 = vector.load %arg6[%c0_4, %c0_5] : memref<8x128xf32, #tpu.memory_space<vmem>>, vector<8x128xf32>
    tpu.vector_store %arg6[%c0_4, %c0_5], %5 {strides = array<i32>} : memref<8x128xf32, #tpu.memory_space<vmem>>, vector<8x128xf32>,
    return
  }
  func.func @transform_0(%arg0: i32, %arg1: i32) -> (i32, i32) {
    %c0_i32 = arith.constant 0 : i32
    %c0_i32_0 = arith.constant 0 : i32
    return %arg0, %c0_i32 : i32, i32
  }
  func.func @transform_1(%arg0: i32, %arg1: i32) -> (i32, i32) {
    %c0_i32 = arith.constant 0 : i32
    %c0_i32_0 = arith.constant 0 : i32
    %c0_i32_1 = arith.constant 0 : i32
    return %c0_i32, %c0_i32_0 : i32, i32
  }
  func.func @transform_2(%arg0: i32, %arg1: i32) -> (i32, i32) {
    %c0_i32 = arith.constant 0 : i32
    %c0_i32_0 = arith.constant 0 : i32
    %c0_i32_1 = arith.constant 0 : i32
    return %c0_i32, %c0_i32_0 : i32, i32
  }
  func.func @transform_3(%arg0: i32, %arg1: i32) -> (i32, i32) {
    %c0_i32 = arith.constant 0 : i32
    %c0_i32_0 = arith.constant 0 : i32
    return %c0_i32, %arg1 : i32, i32
  }
  func.func @transform_4(%arg0: i32, %arg1: i32) -> (i32, i32) {
    %c0_i32 = arith.constant 0 : i32
    return %arg0, %arg1 : i32, i32
  }
}

module attributes {stable_mosaic.version = 11 : i64} {
  func.func @_clip_kernel(%arg0: i32, %arg1: i32, %arg2: memref<8x128xf32, #tpu.memory_space<vmem>>, %arg3: memref<128x128xf32, #tpu.memory_space<vmem>>, %arg4: memref<1x128xf32, #tpu.memory_space<vmem>>, %arg5: memref<128x128xf32, #tpu.memory_space<vmem>>, %arg6: memref<8x128xf32, #tpu.memory_space<vmem>>, %arg7: memref<8x128xf32, #tpu.memory_space<vmem>>) attributes {dimension_semantics = [#tpu.dimension_semantics<parallel>, #tpu.dimension_semantics<arbitrary>], iteration_bounds = array<i64: 3, 2>, scalar_prefetch = 0 : i64, scratch_operands = 1 : i64, tpu.core_type = #tpu.core_type<tc>, window_params = [{transform_indices = @transform_0, window_bounds = array<i64: 8, 128>}, {pipeline_mode = #tpu.pipeline_mode<synchronous>, transform_indices = @transform_1, window_bounds = array<i64: 128, 128>}, {pipeline_mode = #tpu.pipeline_mode<synchronous>, transform_indices = @transform_2, window_bounds = array<i64: 1, 128>}, {transform_indices = @transform_3, window_bounds = array<i64: 128, 128>}, {transform_indices = @transform_4, window_bounds = array<i64: 8, 128>}]} {
    %c0_i32 = arith.constant 0 : i32
    %0 = arith.cmpi eq, %arg1, %c0_i32 : i32
    %1 = arith.extui %0 : i1 to i32
    %c0_i32_0 = arith.constant 0 : i32
    %2 = arith.cmpi ne, %1, %c0_i32_0 : i32
    scf.if %2 {
      %c0_6 = arith.constant 0 : index
      %c0_7 = arith.constant 0 : index
      %7 = vector.load %arg2[%c0_6, %c0_7] : memref<8x128xf32, #tpu.memory_space<vmem>>, vector<8x128xf32>
      %c0_8 = arith.constant 0 : index
      %c0_9 = arith.constant 0 : index
      %8 = vector.load %arg3[%c0_8, %c0_9] : memref<128x128xf32, #tpu.memory_space<vmem>>, vector<128x128xf32>
      %cst_10 = arith.constant dense<0.000000e+00> : vector<8x128xf32>
      %9 = tpu.matmul %7, %8, %cst_10 {dimension_numbers = #tpu.dot_dimension_numbers<[1], [0], [0], [1], [0, 0, 1, 1], [], []>} : vector<8x128xf32>, vector<128x128xf32>, vector<8x128xf32> -> vector<8x128xf32>
      %c0_11 = arith.constant 0 : index
      %c0_12 = arith.constant 0 : index
      %10 = vector.load %arg4[%c0_11, %c0_12] : memref<1x128xf32, #tpu.memory_space<vmem>>, vector<1x128xf32>
      %11 = vector.broadcast %10 : vector<1x128xf32> to vector<8x128xf32>
      %12 = arith.addf %9, %11 : vector<8x128xf32>
      %13 = arith.mulf %12, %12 : vector<8x128xf32>
      %cst_13 = arith.constant dense<0.000000e+00> : vector<8xf32>
      %14 = vector.multi_reduction <add>, %13, %cst_13 [1] : vector<8x128xf32> to vector<8xf32>
      %15 = vector.shape_cast %14 : vector<8xf32> to vector<8x1xf32>
      %cst_14 = arith.constant 9.99999996E-13 : f32
      %16 = vector.broadcast %cst_14 : f32 to vector<8x1xf32>
      %17 = arith.addf %15, %16 : vector<8x1xf32>
      %18 = math.rsqrt %17 : vector<8x1xf32>
      %19 = vector.broadcast %18 : vector<8x1xf32> to vector<8x128xf32>
      %20 = arith.mulf %12, %19 : vector<8x128xf32>
      %c0_15 = arith.constant 0 : index
      %c0_16 = arith.constant 0 : index
      %21 = vector.load %arg7[%c0_15, %c0_16] : memref<8x128xf32, #tpu.memory_space<vmem>>, vector<8x128xf32>
      tpu.vector_store %arg7[%c0_15, %c0_16], %20 {strides = array<i32>} : memref<8x128xf32, #tpu.memory_space<vmem>>, vector<8x128xf32>,
    } else {
    }
    %c0 = arith.constant 0 : index
    %c0_1 = arith.constant 0 : index
    %3 = vector.load %arg7[%c0, %c0_1] : memref<8x128xf32, #tpu.memory_space<vmem>>, vector<8x128xf32>
    %c0_2 = arith.constant 0 : index
    %c0_3 = arith.constant 0 : index
    %4 = vector.load %arg5[%c0_2, %c0_3] : memref<128x128xf32, #tpu.memory_space<vmem>>, vector<128x128xf32>
    %cst = arith.constant dense<0.000000e+00> : vector<8x128xf32>
    %5 = tpu.matmul %3, %4, %cst {dimension_numbers = #tpu.dot_dimension_numbers<[1], [0], [0], [1], [0, 0, 1, 1], [], []>} : vector<8x128xf32>, vector<128x128xf32>, vector<8x128xf32> -> vector<8x128xf32>
    %c0_4 = arith.constant 0 : index
    %c0_5 = arith.constant 0 : index
    %6 = vector.load %arg6[%c0_4, %c0_5] : memref<8x128xf32, #tpu.memory_space<vmem>>, vector<8x128xf32>
    tpu.vector_store %arg6[%c0_4, %c0_5], %5 {strides = array<i32>} : memref<8x128xf32, #tpu.memory_space<vmem>>, vector<8x128xf32>,
    return
  }
  func.func @transform_0(%arg0: i32, %arg1: i32) -> (i32, i32) {
    %c0_i32 = arith.constant 0 : i32
    %c0_i32_0 = arith.constant 0 : i32
    return %arg0, %c0_i32 : i32, i32
  }
  func.func @transform_1(%arg0: i32, %arg1: i32) -> (i32, i32) {
    %c0_i32 = arith.constant 0 : i32
    %c0_i32_0 = arith.constant 0 : i32
    %c0_i32_1 = arith.constant 0 : i32
    return %c0_i32, %c0_i32_0 : i32, i32
  }
  func.func @transform_2(%arg0: i32, %arg1: i32) -> (i32, i32) {
    %c0_i32 = arith.constant 0 : i32
    %c0_i32_0 = arith.constant 0 : i32
    %c0_i32_1 = arith.constant 0 : i32
    return %c0_i32, %c0_i32_0 : i32, i32
  }
  func.func @transform_3(%arg0: i32, %arg1: i32) -> (i32, i32) {
    %c0_i32 = arith.constant 0 : i32
    %c0_i32_0 = arith.constant 0 : i32
    return %c0_i32, %arg1 : i32, i32
  }
  func.func @transform_4(%arg0: i32, %arg1: i32) -> (i32, i32) {
    %c0_i32 = arith.constant 0 : i32
    return %arg0, %arg1 : i32, i32
  }
}

</mosaic_0001>

<llo_original>
// kernel: tpu_custom_call.1
$region0: #{tpu_custom_call.1}
  #allocation0 [shape = 'u32[]', space=smem, size = 0x4, offset = 0x4, fixed_abs, tag = 'smem constant byte address 0x4 - core index']
  #allocation1 [shape = 'u32[72,128]{1,0:T(1,128)}', space=vmem, size = 0x9000, scoped, tag = 'internal scratch']
  #allocation2 [shape = 'f32[8,128]{1,0:T(8,128)}', space=vmem, size = 0x1000, scoped, tag = 'scratch operand']
  %s0 = inlined_call_operand.hbm [shape: f32[24,128], index: 0, kind: input, shape index: {}]
  %s1 = inlined_call_operand.hbm [shape: f32[128,128], index: 1, kind: input, shape index: {}]
  %s2 = inlined_call_operand.vmem [shape: f32[1,128], index: 2, kind: input, shape index: {}]
  %s3 = inlined_call_operand.hbm [shape: f32[128,256], index: 3, kind: input, shape index: {}]
  %s4 = inlined_call_operand.hbm [shape: f32[24,256], index: 4, kind: output, shape index: {}]
  %s5 = sld [smem:[#allocation0]]
  $region65: #{tpu_custom_call.1} parent=0
    _
  %s7 = ssub.s32 1, %s5
  %s8 = scalar_select 0, %s7, %s5
  $region1: #{tpu_custom_call.1} parent=0
    #allocation3 [shape = 'u8[8192]{0}', space=vmem, size = 0x2000, scoped, tag = 'input window, operand 0']
    #allocation4 [shape = 's32[2]{0}', space=sflag, size = 0x8, scoped, tag = 'scoped memory for tpu_custom_call.1']
    #allocation5 [shape = 's32[2]{0}', space=sflag, size = 0x8, scoped, tag = 'scoped memory for tpu_custom_call.1']
    #allocation6 [shape = 'u8[65536]{0}', space=vmem, size = 0x10000, scoped, tag = 'input window, operand 1, single buffered']
    #allocation7 [shape = 's32[1]{0}', space=sflag, size = 0x4, scoped, tag = 'scoped memory for tpu_custom_call.1']
    #allocation8 [shape = 'u8[131072]{0}', space=vmem, size = 0x20000, scoped, tag = 'input window, operand 3']
    #allocation9 [shape = 'u8[8192]{0}', space=vmem, size = 0x2000, scoped, tag = 'output window, operand 0']
    %9 = vsyncpa [#allocation4], 0
    %s10 = scalar_lea.sflag [#allocation4], 1
    %11 = vsyncpa %s10, 0
    %12 = vsyncpa [#allocation7], 0
    %13 = vsyncpa [#allocation5], 0
    %s14 = scalar_lea.sflag [#allocation5], 1
    %15 = vsyncpa %s14, 0
    loop: start=0, step=1, limit=8
    $region2: #{tpu_custom_call.1} parent=1 // loop_pre_header
      _
    $region3: #{tpu_custom_call.1} parent=1 // loop_header
      %s17 = sphi 0, %s21
      %p18 = scmp.ge.s32.totalorder %s17, 8
      %s24 = sphi 0, %s36
      %s25 = sphi 0, %s32
      %s26 = sphi 0, %s24
      %s27 = sphi 0, %s25
      %s28 = sphi 0, %s26
      %s29 = sphi 0, %s27
      %s39 = sphi 0, %s41
      %s42 = sphi 0, %s39
      %s43 = sphi 0, %s42
      %s59 = sphi 0, %s43
      %s63 = sphi 0, %s63
      %s65 = sphi 0, %s63
      %s66 = sphi 0, %s65
      %s80 = sphi 0, %s66
      %s84 = sphi 0, %s84
      %s86 = sphi 0, %s84
      %s87 = sphi 0, %s86
      %s101 = sphi 0, %s87
      %s107 = sphi 0, %s109
      %s110 = sphi 0, %s107
      %s111 = sphi 0, %s110
      %s127 = sphi 0, %s111
      %s135 = sphi 0, %s137
      %s138 = sphi 0, %s135
      %s139 = sphi 0, %s138
      %s155 = sphi 0, %s139
    $region4: #{tpu_custom_call.1} parent=1 // loop_header_branch
      %20 = sbr.rel (%p18) target = $region8
    $region5: #{tpu_custom_call.1} parent=1 // loop_body
      %s22 = ssub.s32 %s17, 1
      %s23 = ssub.s32 %s17, 2
      %s30 = sadd.s32 1, %s25
      %p31 = scmp.ge.s32.totalorder %s30, 2
      %s32 = scalar_select %p31, 0, %s30
      %s33 = sadd.s32 1, %s24
      %s34 = scalar_select %p31, %s33, %s24
      %p35 = scmp.ge.s32.totalorder %s34, 3
      %s36 = scalar_select %p35, 0, %s34
      %s37 = ssub.s32 %s24, %s36
      %p38 = scmp.eq.s32.totalorder %s37, 0
      %s40 = sadd.s32 %s39, 1
      %s41 = scalar_select %p38, %s39, %s40
      %p44 = pneg %p38
      %p45 = scmp.eq.s32.totalorder %s17, 5
      %p46 = por %p44, %p45
      %p47 = scmp.ne.s32.totalorder %s39, %s42
      %p48 = scmp.eq.s32.totalorder %s17, 0
      %p49 = por %p47, %p48
      %p50 = scmp.ne.s32.totalorder %s39, %s42
      %p51 = scmp.eq.s32.totalorder %s22, 5
      %p52 = por %p50, %p51
      %p53 = scmp.ne.s32.totalorder %s42, %s43
      %p54 = scmp.eq.s32.totalorder %s22, 0
      %p55 = por %p53, %p54
      %p56 = scmp.ne.s32.totalorder %s42, %s43
      %p57 = scmp.eq.s32.totalorder %s23, 5
      %p58 = por %p56, %p57
      %p60 = scmp.ne.s32.totalorder %s43, %s59
      %p61 = scmp.eq.s32.totalorder %s23, 0
      %p62 = por %p60, %p61
      %s64 = sadd.s32 %s63, 1
      %p67 = scmp.eq.s32.totalorder %s17, 5
      %p68 = scmp.ne.s32.totalorder %s63, %s65
      %p69 = scmp.eq.s32.totalorder %s17, 0
      %p70 = por %p68, %p69
      %p71 = scmp.ne.s32.totalorder %s63, %s65
      %p72 = scmp.eq.s32.totalorder %s22, 5
      %p73 = por %p71, %p72
      %p74 = scmp.ne.s32.totalorder %s65, %s66
      %p75 = scmp.eq.s32.totalorder %s22, 0
      %p76 = por %p74, %p75
      %p77 = scmp.ne.s32.totalorder %s65, %s66
      %p78 = scmp.eq.s32.totalorder %s23, 5
      %p79 = por %p77, %p78
      %p81 = scmp.ne.s32.totalorder %s66, %s80
      %p82 = scmp.eq.s32.totalorder %s23, 0
      %p83 = por %p81, %p82
      %s85 = sadd.s32 %s84, 1
      %p88 = scmp.eq.s32.totalorder %s17, 5
      %p89 = scmp.ne.s32.totalorder %s84, %s86
      %p90 = scmp.eq.s32.totalorder %s17, 0
      %p91 = por %p89, %p90
      %p92 = scmp.ne.s32.totalorder %s84, %s86
      %p93 = scmp.eq.s32.totalorder %s22, 5
      %p94 = por %p92, %p93
      %p95 = scmp.ne.s32.totalorder %s86, %s87
      %p96 = scmp.eq.s32.totalorder %s22, 0
      %p97 = por %p95, %p96
      %p98 = scmp.ne.s32.totalorder %s86, %s87
      %p99 = scmp.eq.s32.totalorder %s23, 5
      %p100 = por %p98, %p99
      %p102 = scmp.ne.s32.totalorder %s87, %s101
      %p103 = scmp.eq.s32.totalorder %s23, 0
      %p104 = por %p102, %p103
      %s105 = ssub.s32 %s25, %s32
      %p106 = scmp.eq.s32.totalorder %s105, 0
      %s108 = sadd.s32 %s107, 1
      %s109 = scalar_select %p106, %s107, %s108
      %p112 = pneg %p106
      %p113 = scmp.eq.s32.totalorder %s17, 5
      %p114 = por %p112, %p113
      %p115 = scmp.ne.s32.totalorder %s107, %s110
      %p116 = scmp.eq.s32.totalorder %s17, 0
      %p117 = por %p115, %p116
      %p118 = scmp.ne.s32.totalorder %s107, %s110
      %p119 = scmp.eq.s32.totalorder %s22, 5
      %p120 = por %p118, %p119
      %p121 = scmp.ne.s32.totalorder %s110, %s111
      %p122 = scmp.eq.s32.totalorder %s22, 0
      %p123 = por %p121, %p122
      %p124 = scmp.ne.s32.totalorder %s110, %s111
      %p125 = scmp.eq.s32.totalorder %s23, 5
      %p126 = por %p124, %p125
      %p128 = scmp.ne.s32.totalorder %s111, %s127
      %p129 = scmp.eq.s32.totalorder %s23, 0
      %p130 = por %p128, %p129
      %s131 = ssub.s32 %s24, %s36
      %s132 = ssub.s32 %s25, %s32
      %s133 = sor.u32 %s131, %s132
      %p134 = scmp.eq.s32.totalorder %s133, 0
      %s136 = sadd.s32 %s135, 1
      %s137 = scalar_select %p134, %s135, %s136
      %p140 = pneg %p134
      %p141 = scmp.eq.s32.totalorder %s17, 5
      %p142 = por %p140, %p141
      %p143 = scmp.ne.s32.totalorder %s135, %s138
      %p144 = scmp.eq.s32.totalorder %s17, 0
      %p145 = por %p143, %p144
      %p146 = scmp.ne.s32.totalorder %s135, %s138
      %p147 = scmp.eq.s32.totalorder %s22, 5
      %p148 = por %p146, %p147
      %p149 = scmp.ne.s32.totalorder %s138, %s139
      %p150 = scmp.eq.s32.totalorder %s22, 0
      %p151 = por %p149, %p150
      %p152 = scmp.ne.s32.totalorder %s138, %s139
      %p153 = scmp.eq.s32.totalorder %s23, 5
      %p154 = por %p152, %p153
      %p156 = scmp.ne.s32.totalorder %s139, %s155
      %p157 = scmp.eq.s32.totalorder %s23, 0
      %p158 = por %p156, %p157
      %p159 = scmp.le.s32.totalorder 1, %s17
      %p160 = scmp.lt.s32.totalorder %s17, 7
      %p161 = pnand %p159, %p160
      %p162 = pneg %p161
      // Predicated region
      $region9: #{tpu_custom_call.1} parent=5 // pred_check
        _
      $region10: #{tpu_custom_call.1} parent=5 // pred_check_branch
        %164 = sbr.rel (%p161) target = $region12
      $region11: #{tpu_custom_call.1} parent=5 // pred_region
        %s165 = ssub.s32 %s17, 1
        // Predicated region
        $region13: #{tpu_custom_call.1} parent=11 // pred_check
          %p166 = pneg %p76
        $region14: #{tpu_custom_call.1} parent=11 // pred_check_branch
          %168 = sbr.rel (%p166) target = $region16
        $region15: #{tpu_custom_call.1} parent=11 // pred_region
          %170 = vsyncadd [#allocation7], 0
          %s171 = sshll.u32 %s1, 4
          %s172 = int_to_ptr.hbm [resolvable:$true] %s171
          %s173 = sshll.u32 [#allocation6], 4
          %s174 = int_to_ptr.vmem [resolvable:$true] %s173
          %179 = dma.hbm_to_vmem [thread:$0]  %s172, 2048, %s174, [#allocation7], 128, 128, 8
        $region16: #{tpu_custom_call.1} parent=11 // pred_fallthru
          _
        // Predicated region
        $region17: #{tpu_custom_call.1} parent=11 // pred_check
          %p180 = pneg %p97
        $region18: #{tpu_custom_call.1} parent=11 // pred_check_branch
          %182 = sbr.rel (%p180) target = $region20
        $region19: #{tpu_custom_call.1} parent=11 // pred_region
          _
        $region20: #{tpu_custom_call.1} parent=11 // pred_fallthru
          _
      $region12: #{tpu_custom_call.1} parent=5 // pred_fallthru
        _
      %p183 = scmp.lt.s32.totalorder %s17, 6
      // Predicated region
      $region21: #{tpu_custom_call.1} parent=5 // pred_check
        %p184 = pneg %p183
      $region22: #{tpu_custom_call.1} parent=5 // pred_check_branch
        %186 = sbr.rel (%p184) target = $region24
      $region23: #{tpu_custom_call.1} parent=5 // pred_region
        // Predicated region
        $region25: #{tpu_custom_call.1} parent=23 // pred_check
          %p187 = pneg %p49
        $region26: #{tpu_custom_call.1} parent=23 // pred_check_branch
          %189 = sbr.rel (%p187) target = $region28
        $region27: #{tpu_custom_call.1} parent=23 // pred_region
          %s190 = sand.u32 %s17, 1
          %s191 = scalar_lea.sflag [#allocation4], %s190
          %s192 = sand.u32 %s39, 1
          %s193 = smul.addr %s192, 8
          %s194 = scalar_lea.vmem [#allocation3], %s193
          %196 = vsyncadd %s191, 0
          %s197 = smul.addr %s24, 8
          %s198 = scalar_lea.hbm %s0, %s197
          %s200 = sshll.u32 %s198, 4
          %s201 = int_to_ptr.hbm [resolvable:$true] %s200
          %s202 = sshll.u32 %s194, 4
          %s203 = int_to_ptr.vmem [resolvable:$true] %s202
          %205 = dma.hbm_to_vmem [thread:$0]  %s201, 128, %s203, %s191
        $region28: #{tpu_custom_call.1} parent=23 // pred_fallthru
          _
        // Predicated region
        $region29: #{tpu_custom_call.1} parent=23 // pred_check
          %p206 = pneg %p117
        $region30: #{tpu_custom_call.1} parent=23 // pred_check_branch
          %208 = sbr.rel (%p206) target = $region32
        $region31: #{tpu_custom_call.1} parent=23 // pred_region
          %s209 = sand.u32 %s17, 1
          %s210 = scalar_lea.sflag [#allocation4], %s209
          %s211 = sand.u32 %s107, 1
          %s212 = smul.addr %s211, 128
          %s213 = scalar_lea.vmem [#allocation8], %s212
          %215 = vsyncadd %s210, 0
          %s216 = smul.addr %s25, 8
          %s217 = scalar_lea.hbm %s3, %s216
          %s218 = sshll.u32 %s217, 4
          %s219 = int_to_ptr.hbm [resolvable:$true] %s218
          %s220 = sshll.u32 %s213, 4
          %s221 = int_to_ptr.vmem [resolvable:$true] %s220
          %226 = dma.hbm_to_vmem [thread:$0]  %s219, 2048, %s221, %s210, 256, 128, 8
        $region32: #{tpu_custom_call.1} parent=23 // pred_fallthru
          _
      $region24: #{tpu_custom_call.1} parent=5 // pred_fallthru
        _
      %p227 = scmp.le.s32.totalorder 1, %s17
      %p228 = scmp.lt.s32.totalorder %s17, 7
      %p229 = pnand %p227, %p228
      %p230 = pneg %p229
      // Predicated region
      $region33: #{tpu_custom_call.1} parent=5 // pred_check
        _
      $region34: #{tpu_custom_call.1} parent=5 // pred_check_branch
        %232 = sbr.rel (%p229) target = $region36
      $region35: #{tpu_custom_call.1} parent=5 // pred_region
        %s233 = ssub.s32 %s17, 1
        %s234 = sand.u32 %s22, 1
        %s235 = scalar_lea.sflag [#allocation4], %s234
        %s236 = sand.u32 %s42, 1
        %s237 = smul.addr %s236, 8
        %s238 = scalar_lea.vmem [#allocation3], %s237
        // Predicated region
        $region37: #{tpu_custom_call.1} parent=35 // pred_check
          %p239 = pneg %p55
        $region38: #{tpu_custom_call.1} parent=35 // pred_check_branch
          %241 = sbr.rel (%p239) target = $region40
        $region39: #{tpu_custom_call.1} parent=35 // pred_region
          %243 = dma.done %s235, 128
        $region40: #{tpu_custom_call.1} parent=35 // pred_fallthru
          _
        // Predicated region
        $region41: #{tpu_custom_call.1} parent=35 // pred_check
          %p244 = pneg %p76
        $region42: #{tpu_custom_call.1} parent=35 // pred_check_branch
          %246 = sbr.rel (%p244) target = $region44
        $region43: #{tpu_custom_call.1} parent=35 // pred_region
          %248 = dma.done [#allocation7], 2048
        $region44: #{tpu_custom_call.1} parent=35 // pred_fallthru
          _
        %s249 = sand.u32 %s22, 1
        %s250 = scalar_lea.sflag [#allocation4], %s249
        %s251 = sand.u32 %s110, 1
        %s252 = smul.addr %s251, 128
        %s253 = scalar_lea.vmem [#allocation8], %s252
        // Predicated region
        $region45: #{tpu_custom_call.1} parent=35 // pred_check
          %p254 = pneg %p123
        $region46: #{tpu_custom_call.1} parent=35 // pred_check_branch
          %256 = sbr.rel (%p254) target = $region48
        $region47: #{tpu_custom_call.1} parent=35 // pred_region
          %258 = dma.done %s250, 2048
        $region48: #{tpu_custom_call.1} parent=35 // pred_fallthru
          _
        %s259 = sand.u32 %s22, 1
        %s260 = scalar_lea.sflag [#allocation4], %s259
        %s261 = sand.u32 %s42, 1
        %s262 = smul.addr %s261, 8
        %s263 = scalar_lea.vmem [#allocation3], %s262
        %p264 = pneg %p55
        %p265 = pneg %p52
        %p266 = pneg %p76
        %p267 = pneg %p73
        %p268 = pneg %p97
        %p269 = pneg %p94
        %s270 = sand.u32 %s22, 1
        %s271 = scalar_lea.sflag [#allocation4], %s270
        %s272 = sand.u32 %s110, 1
        %s273 = smul.addr %s272, 128
        %s274 = scalar_lea.vmem [#allocation8], %s273
        %p275 = pneg %p123
        %p276 = pneg %p120
        %p277 = pneg %p151
        %p278 = pneg %p148
        %s279 = sand.u32 %s138, 1
        %s280 = scalar_lea.sflag [#allocation5], %s279
        %s281 = sand.u32 %s138, 1
        %s282 = smul.addr %s281, 8
        %s283 = scalar_lea.vmem [#allocation9], %s282
        %p284 = scmp.eq.s32.totalorder %s27, 0
        // Predicated region
        $region49: #{tpu_custom_call.1} parent=35 // pred_check
          %p285 = pneg %p284
        $region50: #{tpu_custom_call.1} parent=35 // pred_check_branch
          %287 = sbr.rel (%p285) target = $region52
        $region51: #{tpu_custom_call.1} parent=35 // pred_region
          %v288 = vld [vmem:[%s238] sm:$0xff]
          %v289 = vld [vmem:[#allocation6] sm:$0xff]
          %v290 = vld [vmem:[#allocation6 + $0x8] sm:$0xff]
          %v291 = vld [vmem:[#allocation6 + $0x10] sm:$0xff]
          %v292 = vld [vmem:[#allocation6 + $0x18] sm:$0xff]
          %v293 = vld [vmem:[#allocation6 + $0x20] sm:$0xff]
          %v294 = vld [vmem:[#allocation6 + $0x28] sm:$0xff]
          %v295 = vld [vmem:[#allocation6 + $0x30] sm:$0xff]
          %v296 = vld [vmem:[#allocation6 + $0x38] sm:$0xff]
          %v297 = vld [vmem:[#allocation6 + $0x40] sm:$0xff]
          %v298 = vld [vmem:[#allocation6 + $0x48] sm:$0xff]
          %v299 = vld [vmem:[#allocation6 + $0x50] sm:$0xff]
          %v300 = vld [vmem:[#allocation6 + $0x58] sm:$0xff]
          %v301 = vld [vmem:[#allocation6 + $0x60] sm:$0xff]
          %v302 = vld [vmem:[#allocation6 + $0x68] sm:$0xff]
          %v303 = vld [vmem:[#allocation6 + $0x70] sm:$0xff]
          %v304 = vld [vmem:[#allocation6 + $0x78] sm:$0xff]
          %v305 = vld [vmem:[%s2] sm:$0x1]
          %v307 = vperm.slane %v305, 0
          %309 = vmatpush.msra.mxu0 %v304
          %310 = vmatpush.msra.mxu0 %v303
          %311 = vmatpush.msra.mxu0 %v302
          %312 = vmatpush.msra.mxu0 %v301
          %313 = vmatpush.msra.mxu0 %v300
          %314 = vmatpush.msra.mxu0 %v299
          %315 = vmatpush.msra.mxu0 %v298
          %316 = vmatpush.msra.mxu0 %v297
          %317 = vmatpush.msra.mxu0 %v296
          %318 = vmatpush.msra.mxu0 %v295
          %319 = vmatpush.msra.mxu0 %v294
          %320 = vmatpush.msra.mxu0 %v293
          %321 = vmatpush.msra.mxu0 %v292
          %322 = vmatpush.msra.mxu0 %v291
          %323 = vmatpush.msra.mxu0 %v290
          %324 = vmatpush.msra.mxu0 %v289
          %325 = vmatmul.f32.gmra.mxu0 %v288
          %v326 = vpop.f32.mrf.mxu0
          %v327 = vadd.f32 %v307, %v326
          %328 = vdwg.mxu0
          %v329 = vmul.f32 %v327, %v327
          %330 = vadd.xlane.f32.xlu0 %v329
          %v331 = vpop.xlane.xlu0 %330
          %v332 = vadd.f32 %v331, 1e-12
          %v333 = vrsqrt.pop %v332
          %v334 = vmul.f32 %v333, %v332
          %v335 = vmul.f32 %v334, %v333
          %v336 = vmul.f32 0.5, %v335
          %v337 = vsub.f32 1.5, %v336
          %v338 = vmul.f32 %v333, %v337
          %vm339 = vweird.f32 %v332
          %vm340 = vweird.f32 %v333
          %vm341 = vmor %vm339, %vm340
          %v342 = vsel %vm341, %v333, %v338
          %v343 = vmul.f32 %v327, %v342
          %344 = vst [vmem:[#allocation2] sm:$0xff] %v343
        $region52: #{tpu_custom_call.1} parent=35 // pred_fallthru
          _
        %v345 = vld [vmem:[#allocation2] sm:$0xff]
        %v346 = vld [vmem:[%s253] sm:$0xff]
        %v347 = vld [vmem:[%s253 + $0x8] sm:$0xff]
        %v348 = vld [vmem:[%s253 + $0x10] sm:$0xff]
        %v349 = vld [vmem:[%s253 + $0x18] sm:$0xff]
        %v350 = vld [vmem:[%s253 + $0x20] sm:$0xff]
        %v351 = vld [vmem:[%s253 + $0x28] sm:$0xff]
        %v352 = vld [vmem:[%s253 + $0x30] sm:$0xff]
        %v353 = vld [vmem:[%s253 + $0x38] sm:$0xff]
        %v354 = vld [vmem:[%s253 + $0x40] sm:$0xff]
        %v355 = vld [vmem:[%s253 + $0x48] sm:$0xff]
        %v356 = vld [vmem:[%s253 + $0x50] sm:$0xff]
        %v357 = vld [vmem:[%s253 + $0x58] sm:$0xff]
        %v358 = vld [vmem:[%s253 + $0x60] sm:$0xff]
        %v359 = vld [vmem:[%s253 + $0x68] sm:$0xff]
        %v360 = vld [vmem:[%s253 + $0x70] sm:$0xff]
        %v361 = vld [vmem:[%s253 + $0x78] sm:$0xff]
        %362 = vmatpush.msra.mxu0 %v361
        %363 = vmatpush.msra.mxu0 %v360
        %364 = vmatpush.msra.mxu0 %v359
        %365 = vmatpush.msra.mxu0 %v358
        %366 = vmatpush.msra.mxu0 %v357
        %367 = vmatpush.msra.mxu0 %v356
        %368 = vmatpush.msra.mxu0 %v355
        %369 = vmatpush.msra.mxu0 %v354
        %370 = vmatpush.msra.mxu0 %v353
        %371 = vmatpush.msra.mxu0 %v352
        %372 = vmatpush.msra.mxu0 %v351
        %373 = vmatpush.msra.mxu0 %v350
        %374 = vmatpush.msra.mxu0 %v349
        %375 = vmatpush.msra.mxu0 %v348
        %376 = vmatpush.msra.mxu0 %v347
        %377 = vmatpush.msra.mxu0 %v346
        %378 = vmatmul.f32.gmra.mxu0 %v345
        %v379 = vpop.f32.mrf.mxu0
        %v380 = vadd.f32 0.0, %v379
        %381 = vdwg.mxu0
        %382 = vst [vmem:[%s283] sm:$0xff] %v380
        %s383 = sand.u32 %s138, 1
        %s384 = scalar_lea.sflag [#allocation5], %s383
        %s385 = sand.u32 %s138, 1
        %s386 = smul.addr %s385, 8
        %s387 = scalar_lea.vmem [#allocation9], %s386
        // Predicated region
        $region53: #{tpu_custom_call.1} parent=35 // pred_check
          %p388 = pneg %p148
        $region54: #{tpu_custom_call.1} parent=35 // pred_check_branch
          %390 = sbr.rel (%p388) target = $region56
        $region55: #{tpu_custom_call.1} parent=35 // pred_region
          %392 = vsyncadd %s384, 0
          %s393 = smul.addr %s26, 2
          %s394 = sadd.s32 %s27, %s393
          %s395 = smul.addr %s394, 8
          %s396 = scalar_lea.hbm %s4, %s395
          %s398 = sshll.u32 %s387, 4
          %s399 = int_to_ptr.vmem [resolvable:$true] %s398
          %s400 = sshll.u32 %s396, 4
          %s401 = int_to_ptr.hbm [resolvable:$true] %s400
          %403 = dma.vmem_to_hbm [thread:$0]  %s399, 128, %s401, %s384
        $region56: #{tpu_custom_call.1} parent=35 // pred_fallthru
          _
      $region36: #{tpu_custom_call.1} parent=5 // pred_fallthru
        _
      %p404 = scmp.le.s32.totalorder 2, %s17
      // Predicated region
      $region57: #{tpu_custom_call.1} parent=5 // pred_check
        %p405 = pneg %p404
      $region58: #{tpu_custom_call.1} parent=5 // pred_check_branch
        %407 = sbr.rel (%p405) target = $region60
      $region59: #{tpu_custom_call.1} parent=5 // pred_region
        %s408 = ssub.s32 %s17, 2
        // Predicated region
        $region61: #{tpu_custom_call.1} parent=59 // pred_check
          %p409 = pneg %p154
        $region62: #{tpu_custom_call.1} parent=59 // pred_check_branch
          %411 = sbr.rel (%p409) target = $region64
        $region63: #{tpu_custom_call.1} parent=59 // pred_region
          %s412 = sand.u32 %s139, 1
          %s413 = scalar_lea.sflag [#allocation5], %s412
          %s414 = sand.u32 %s139, 1
          %s415 = smul.addr %s414, 8
          %s416 = scalar_lea.vmem [#allocation9], %s415
          %418 = dma.done %s413, 128
        $region64: #{tpu_custom_call.1} parent=59 // pred_fallthru
          _
      $region60: #{tpu_custom_call.1} parent=5 // pred_fallthru
        _
    $region6: #{tpu_custom_call.1} parent=1 // loop_footer
      %s21 = sadd.s32 1, %s17
    $region7: #{tpu_custom_call.1} parent=1 // loop_footer_branch
      %16 = sbr.rel target = $region3
    $region8: #{tpu_custom_call.1} parent=1 // loop_exit
      _
    %419 = vsyncpa [#allocation4], 1
    %s420 = scalar_lea.sflag [#allocation4], 1
    %421 = vsyncpa %s420, 1
    %422 = vsyncpa [#allocation7], 1
    %423 = vsyncpa [#allocation5], 1
    %s424 = scalar_lea.sflag [#allocation5], 1
    %425 = vsyncpa %s424, 1

// kernel: tpu_custom_call.1
$region0: #{tpu_custom_call.1}
  #allocation0 [shape = 'u32[]', space=smem, size = 0x4, offset = 0x4, fixed_abs, tag = 'smem constant byte address 0x4 - core index']
  #allocation1 [shape = 'u32[72,128]{1,0:T(1,128)}', space=vmem, size = 0x9000, scoped, tag = 'internal scratch']
  #allocation2 [shape = 'f32[8,128]{1,0:T(8,128)}', space=vmem, size = 0x1000, scoped, tag = 'scratch operand']
  %s0 = inlined_call_operand.hbm [shape: f32[24,128], index: 0, kind: input, shape index: {}]
  %s1 = inlined_call_operand.hbm [shape: f32[128,128], index: 1, kind: input, shape index: {}]
  %s2 = inlined_call_operand.vmem [shape: f32[1,128], index: 2, kind: input, shape index: {}]
  %s3 = inlined_call_operand.hbm [shape: f32[128,256], index: 3, kind: input, shape index: {}]
  %s4 = inlined_call_operand.hbm [shape: f32[24,256], index: 4, kind: output, shape index: {}]
  %s5 = sld [smem:[#allocation0]]
  $region65: #{tpu_custom_call.1} parent=0
    _
  %s7 = ssub.s32 1, %s5
  %s8 = scalar_select 0, %s7, %s5
  $region1: #{tpu_custom_call.1} parent=0
    #allocation3 [shape = 'u8[8192]{0}', space=vmem, size = 0x2000, scoped, tag = 'input window, operand 0']
    #allocation4 [shape = 's32[2]{0}', space=sflag, size = 0x8, scoped, tag = 'scoped memory for tpu_custom_call.1']
    #allocation5 [shape = 's32[2]{0}', space=sflag, size = 0x8, scoped, tag = 'scoped memory for tpu_custom_call.1']
    #allocation6 [shape = 'u8[65536]{0}', space=vmem, size = 0x10000, scoped, tag = 'input window, operand 1, single buffered']
    #allocation7 [shape = 's32[1]{0}', space=sflag, size = 0x4, scoped, tag = 'scoped memory for tpu_custom_call.1']
    #allocation8 [shape = 'u8[131072]{0}', space=vmem, size = 0x20000, scoped, tag = 'input window, operand 3']
    #allocation9 [shape = 'u8[8192]{0}', space=vmem, size = 0x2000, scoped, tag = 'output window, operand 0']
    %9 = vsyncpa [#allocation4], 0
    %s10 = scalar_lea.sflag [#allocation4], 1
    %11 = vsyncpa %s10, 0
    %12 = vsyncpa [#allocation7], 0
    %13 = vsyncpa [#allocation5], 0
    %s14 = scalar_lea.sflag [#allocation5], 1
    %15 = vsyncpa %s14, 0
    loop: start=0, step=1, limit=8
    $region2: #{tpu_custom_call.1} parent=1 // loop_pre_header
      _
    $region3: #{tpu_custom_call.1} parent=1 // loop_header
      %s17 = sphi 0, %s21
      %p18 = scmp.ge.s32.totalorder %s17, 8
      %s24 = sphi 0, %s36
      %s25 = sphi 0, %s32
      %s26 = sphi 0, %s24
      %s27 = sphi 0, %s25
      %s28 = sphi 0, %s26
      %s29 = sphi 0, %s27
      %s39 = sphi 0, %s41
      %s42 = sphi 0, %s39
      %s43 = sphi 0, %s42
      %s59 = sphi 0, %s43
      %s63 = sphi 0, %s63
      %s65 = sphi 0, %s63
      %s66 = sphi 0, %s65
      %s80 = sphi 0, %s66
      %s84 = sphi 0, %s84
      %s86 = sphi 0, %s84
      %s87 = sphi 0, %s86
      %s101 = sphi 0, %s87
      %s107 = sphi 0, %s109
      %s110 = sphi 0, %s107
      %s111 = sphi 0, %s110
      %s127 = sphi 0, %s111
      %s135 = sphi 0, %s137
      %s138 = sphi 0, %s135
      %s139 = sphi 0, %s138
      %s155 = sphi 0, %s139
    $region4: #{tpu_custom_call.1} parent=1 // loop_header_branch
      %20 = sbr.rel (%p18) target = $region8
    $region5: #{tpu_custom_call.1} parent=1 // loop_body
      %s22 = ssub.s32 %s17, 1
      %s23 = ssub.s32 %s17, 2
      %s30 = sadd.s32 1, %s25
      %p31 = scmp.ge.s32.totalorder %s30, 2
      %s32 = scalar_select %p31, 0, %s30
      %s33 = sadd.s32 1, %s24
      %s34 = scalar_select %p31, %s33, %s24
      %p35 = scmp.ge.s32.totalorder %s34, 3
      %s36 = scalar_select %p35, 0, %s34
      %s37 = ssub.s32 %s24, %s36
      %p38 = scmp.eq.s32.totalorder %s37, 0
      %s40 = sadd.s32 %s39, 1
      %s41 = scalar_select %p38, %s39, %s40
      %p44 = pneg %p38
      %p45 = scmp.eq.s32.totalorder %s17, 5
      %p46 = por %p44, %p45
      %p47 = scmp.ne.s32.totalorder %s39, %s42
      %p48 = scmp.eq.s32.totalorder %s17, 0
      %p49 = por %p47, %p48
      %p50 = scmp.ne.s32.totalorder %s39, %s42
      %p51 = scmp.eq.s32.totalorder %s22, 5
      %p52 = por %p50, %p51
      %p53 = scmp.ne.s32.totalorder %s42, %s43
      %p54 = scmp.eq.s32.totalorder %s22, 0
      %p55 = por %p53, %p54
      %p56 = scmp.ne.s32.totalorder %s42, %s43
      %p57 = scmp.eq.s32.totalorder %s23, 5
      %p58 = por %p56, %p57
      %p60 = scmp.ne.s32.totalorder %s43, %s59
      %p61 = scmp.eq.s32.totalorder %s23, 0
      %p62 = por %p60, %p61
      %s64 = sadd.s32 %s63, 1
      %p67 = scmp.eq.s32.totalorder %s17, 5
      %p68 = scmp.ne.s32.totalorder %s63, %s65
      %p69 = scmp.eq.s32.totalorder %s17, 0
      %p70 = por %p68, %p69
      %p71 = scmp.ne.s32.totalorder %s63, %s65
      %p72 = scmp.eq.s32.totalorder %s22, 5
      %p73 = por %p71, %p72
      %p74 = scmp.ne.s32.totalorder %s65, %s66
      %p75 = scmp.eq.s32.totalorder %s22, 0
      %p76 = por %p74, %p75
      %p77 = scmp.ne.s32.totalorder %s65, %s66
      %p78 = scmp.eq.s32.totalorder %s23, 5
      %p79 = por %p77, %p78
      %p81 = scmp.ne.s32.totalorder %s66, %s80
      %p82 = scmp.eq.s32.totalorder %s23, 0
      %p83 = por %p81, %p82
      %s85 = sadd.s32 %s84, 1
      %p88 = scmp.eq.s32.totalorder %s17, 5
      %p89 = scmp.ne.s32.totalorder %s84, %s86
      %p90 = scmp.eq.s32.totalorder %s17, 0
      %p91 = por %p89, %p90
      %p92 = scmp.ne.s32.totalorder %s84, %s86
      %p93 = scmp.eq.s32.totalorder %s22, 5
      %p94 = por %p92, %p93
      %p95 = scmp.ne.s32.totalorder %s86, %s87
      %p96 = scmp.eq.s32.totalorder %s22, 0
      %p97 = por %p95, %p96
      %p98 = scmp.ne.s32.totalorder %s86, %s87
      %p99 = scmp.eq.s32.totalorder %s23, 5
      %p100 = por %p98, %p99
      %p102 = scmp.ne.s32.totalorder %s87, %s101
      %p103 = scmp.eq.s32.totalorder %s23, 0
      %p104 = por %p102, %p103
      %s105 = ssub.s32 %s25, %s32
      %p106 = scmp.eq.s32.totalorder %s105, 0
      %s108 = sadd.s32 %s107, 1
      %s109 = scalar_select %p106, %s107, %s108
      %p112 = pneg %p106
      %p113 = scmp.eq.s32.totalorder %s17, 5
      %p114 = por %p112, %p113
      %p115 = scmp.ne.s32.totalorder %s107, %s110
      %p116 = scmp.eq.s32.totalorder %s17, 0
      %p117 = por %p115, %p116
      %p118 = scmp.ne.s32.totalorder %s107, %s110
      %p119 = scmp.eq.s32.totalorder %s22, 5
      %p120 = por %p118, %p119
      %p121 = scmp.ne.s32.totalorder %s110, %s111
      %p122 = scmp.eq.s32.totalorder %s22, 0
      %p123 = por %p121, %p122
      %p124 = scmp.ne.s32.totalorder %s110, %s111
      %p125 = scmp.eq.s32.totalorder %s23, 5
      %p126 = por %p124, %p125
      %p128 = scmp.ne.s32.totalorder %s111, %s127
      %p129 = scmp.eq.s32.totalorder %s23, 0
      %p130 = por %p128, %p129
      %s131 = ssub.s32 %s24, %s36
      %s132 = ssub.s32 %s25, %s32
      %s133 = sor.u32 %s131, %s132
      %p134 = scmp.eq.s32.totalorder %s133, 0
      %s136 = sadd.s32 %s135, 1
      %s137 = scalar_select %p134, %s135, %s136
      %p140 = pneg %p134
      %p141 = scmp.eq.s32.totalorder %s17, 5
      %p142 = por %p140, %p141
      %p143 = scmp.ne.s32.totalorder %s135, %s138
      %p144 = scmp.eq.s32.totalorder %s17, 0
      %p145 = por %p143, %p144
      %p146 = scmp.ne.s32.totalorder %s135, %s138
      %p147 = scmp.eq.s32.totalorder %s22, 5
      %p148 = por %p146, %p147
      %p149 = scmp.ne.s32.totalorder %s138, %s139
      %p150 = scmp.eq.s32.totalorder %s22, 0
      %p151 = por %p149, %p150
      %p152 = scmp.ne.s32.totalorder %s138, %s139
      %p153 = scmp.eq.s32.totalorder %s23, 5
      %p154 = por %p152, %p153
      %p156 = scmp.ne.s32.totalorder %s139, %s155
      %p157 = scmp.eq.s32.totalorder %s23, 0
      %p158 = por %p156, %p157
      %p159 = scmp.le.s32.totalorder 1, %s17
      %p160 = scmp.lt.s32.totalorder %s17, 7
      %p161 = pnand %p159, %p160
      %p162 = pneg %p161
      // Predicated region
      $region9: #{tpu_custom_call.1} parent=5 // pred_check
        _
      $region10: #{tpu_custom_call.1} parent=5 // pred_check_branch
        %164 = sbr.rel (%p161) target = $region12
      $region11: #{tpu_custom_call.1} parent=5 // pred_region
        %s165 = ssub.s32 %s17, 1
        // Predicated region
        $region13: #{tpu_custom_call.1} parent=11 // pred_check
          %p166 = pneg %p76
        $region14: #{tpu_custom_call.1} parent=11 // pred_check_branch
          %168 = sbr.rel (%p166) target = $region16
        $region15: #{tpu_custom_call.1} parent=11 // pred_region
          %170 = vsyncadd [#allocation7], 0
          %s171 = sshll.u32 %s1, 4
          %s172 = int_to_ptr.hbm [resolvable:$true] %s171
          %s173 = sshll.u32 [#allocation6], 4
          %s174 = int_to_ptr.vmem [resolvable:$true] %s173
          %179 = dma.hbm_to_vmem [thread:$0]  %s172, 2048, %s174, [#allocation7], 128, 128, 8
        $region16: #{tpu_custom_call.1} parent=11 // pred_fallthru
          _
        // Predicated region
        $region17: #{tpu_custom_call.1} parent=11 // pred_check
          %p180 = pneg %p97
        $region18: #{tpu_custom_call.1} parent=11 // pred_check_branch
          %182 = sbr.rel (%p180) target = $region20
        $region19: #{tpu_custom_call.1} parent=11 // pred_region
          _
        $region20: #{tpu_custom_call.1} parent=11 // pred_fallthru
          _
      $region12: #{tpu_custom_call.1} parent=5 // pred_fallthru
        _
      %p183 = scmp.lt.s32.totalorder %s17, 6
      // Predicated region
      $region21: #{tpu_custom_call.1} parent=5 // pred_check
        %p184 = pneg %p183
      $region22: #{tpu_custom_call.1} parent=5 // pred_check_branch
        %186 = sbr.rel (%p184) target = $region24
      $region23: #{tpu_custom_call.1} parent=5 // pred_region
        // Predicated region
        $region25: #{tpu_custom_call.1} parent=23 // pred_check
          %p187 = pneg %p49
        $region26: #{tpu_custom_call.1} parent=23 // pred_check_branch
          %189 = sbr.rel (%p187) target = $region28
        $region27: #{tpu_custom_call.1} parent=23 // pred_region
          %s190 = sand.u32 %s17, 1
          %s191 = scalar_lea.sflag [#allocation4], %s190
          %s192 = sand.u32 %s39, 1
          %s193 = smul.addr %s192, 8
          %s194 = scalar_lea.vmem [#allocation3], %s193
          %196 = vsyncadd %s191, 0
          %s197 = smul.addr %s24, 8
          %s198 = scalar_lea.hbm %s0, %s197
          %s200 = sshll.u32 %s198, 4
          %s201 = int_to_ptr.hbm [resolvable:$true] %s200
          %s202 = sshll.u32 %s194, 4
          %s203 = int_to_ptr.vmem [resolvable:$true] %s202
          %205 = dma.hbm_to_vmem [thread:$0]  %s201, 128, %s203, %s191
        $region28: #{tpu_custom_call.1} parent=23 // pred_fallthru
          _
        // Predicated region
        $region29: #{tpu_custom_call.1} parent=23 // pred_check
          %p206 = pneg %p117
        $region30: #{tpu_custom_call.1} parent=23 // pred_check_branch
          %208 = sbr.rel (%p206) target = $region32
        $region31: #{tpu_custom_call.1} parent=23 // pred_region
          %s209 = sand.u32 %s17, 1
          %s210 = scalar_lea.sflag [#allocation4], %s209
          %s211 = sand.u32 %s107, 1
          %s212 = smul.addr %s211, 128
          %s213 = scalar_lea.vmem [#allocation8], %s212
          %215 = vsyncadd %s210, 0
          %s216 = smul.addr %s25, 8
          %s217 = scalar_lea.hbm %s3, %s216
          %s218 = sshll.u32 %s217, 4
          %s219 = int_to_ptr.hbm [resolvable:$true] %s218
          %s220 = sshll.u32 %s213, 4
          %s221 = int_to_ptr.vmem [resolvable:$true] %s220
          %226 = dma.hbm_to_vmem [thread:$0]  %s219, 2048, %s221, %s210, 256, 128, 8
        $region32: #{tpu_custom_call.1} parent=23 // pred_fallthru
          _
      $region24: #{tpu_custom_call.1} parent=5 // pred_fallthru
        _
      %p227 = scmp.le.s32.totalorder 1, %s17
      %p228 = scmp.lt.s32.totalorder %s17, 7
      %p229 = pnand %p227, %p228
      %p230 = pneg %p229
      // Predicated region
      $region33: #{tpu_custom_call.1} parent=5 // pred_check
        _
      $region34: #{tpu_custom_call.1} parent=5 // pred_check_branch
        %232 = sbr.rel (%p229) target = $region36
      $region35: #{tpu_custom_call.1} parent=5 // pred_region
        %s233 = ssub.s32 %s17, 1
        %s234 = sand.u32 %s22, 1
        %s235 = scalar_lea.sflag [#allocation4], %s234
        %s236 = sand.u32 %s42, 1
        %s237 = smul.addr %s236, 8
        %s238 = scalar_lea.vmem [#allocation3], %s237
        // Predicated region
        $region37: #{tpu_custom_call.1} parent=35 // pred_check
          %p239 = pneg %p55
        $region38: #{tpu_custom_call.1} parent=35 // pred_check_branch
          %241 = sbr.rel (%p239) target = $region40
        $region39: #{tpu_custom_call.1} parent=35 // pred_region
          %243 = dma.done %s235, 128
        $region40: #{tpu_custom_call.1} parent=35 // pred_fallthru
          _
        // Predicated region
        $region41: #{tpu_custom_call.1} parent=35 // pred_check
          %p244 = pneg %p76
        $region42: #{tpu_custom_call.1} parent=35 // pred_check_branch
          %246 = sbr.rel (%p244) target = $region44
        $region43: #{tpu_custom_call.1} parent=35 // pred_region
          %248 = dma.done [#allocation7], 2048
        $region44: #{tpu_custom_call.1} parent=35 // pred_fallthru
          _
        %s249 = sand.u32 %s22, 1
        %s250 = scalar_lea.sflag [#allocation4], %s249
        %s251 = sand.u32 %s110, 1
        %s252 = smul.addr %s251, 128
        %s253 = scalar_lea.vmem [#allocation8], %s252
        // Predicated region
        $region45: #{tpu_custom_call.1} parent=35 // pred_check
          %p254 = pneg %p123
        $region46: #{tpu_custom_call.1} parent=35 // pred_check_branch
          %256 = sbr.rel (%p254) target = $region48
        $region47: #{tpu_custom_call.1} parent=35 // pred_region
          %258 = dma.done %s250, 2048
        $region48: #{tpu_custom_call.1} parent=35 // pred_fallthru
          _
        %s259 = sand.u32 %s22, 1
        %s260 = scalar_lea.sflag [#allocation4], %s259
        %s261 = sand.u32 %s42, 1
        %s262 = smul.addr %s261, 8
        %s263 = scalar_lea.vmem [#allocation3], %s262
        %p264 = pneg %p55
        %p265 = pneg %p52
        %p266 = pneg %p76
        %p267 = pneg %p73
        %p268 = pneg %p97
        %p269 = pneg %p94
        %s270 = sand.u32 %s22, 1
        %s271 = scalar_lea.sflag [#allocation4], %s270
        %s272 = sand.u32 %s110, 1
        %s273 = smul.addr %s272, 128
        %s274 = scalar_lea.vmem [#allocation8], %s273
        %p275 = pneg %p123
        %p276 = pneg %p120
        %p277 = pneg %p151
        %p278 = pneg %p148
        %s279 = sand.u32 %s138, 1
        %s280 = scalar_lea.sflag [#allocation5], %s279
        %s281 = sand.u32 %s138, 1
        %s282 = smul.addr %s281, 8
        %s283 = scalar_lea.vmem [#allocation9], %s282
        %p284 = scmp.eq.s32.totalorder %s27, 0
        // Predicated region
        $region49: #{tpu_custom_call.1} parent=35 // pred_check
          %p285 = pneg %p284
        $region50: #{tpu_custom_call.1} parent=35 // pred_check_branch
          %287 = sbr.rel (%p285) target = $region52
        $region51: #{tpu_custom_call.1} parent=35 // pred_region
          %v288 = vld [vmem:[%s238] sm:$0xff]
          %v289 = vld [vmem:[#allocation6] sm:$0xff]
          %v290 = vld [vmem:[#allocation6 + $0x8] sm:$0xff]
          %v291 = vld [vmem:[#allocation6 + $0x10] sm:$0xff]
          %v292 = vld [vmem:[#allocation6 + $0x18] sm:$0xff]
          %v293 = vld [vmem:[#allocation6 + $0x20] sm:$0xff]
          %v294 = vld [vmem:[#allocation6 + $0x28] sm:$0xff]
          %v295 = vld [vmem:[#allocation6 + $0x30] sm:$0xff]
          %v296 = vld [vmem:[#allocation6 + $0x38] sm:$0xff]
          %v297 = vld [vmem:[#allocation6 + $0x40] sm:$0xff]
          %v298 = vld [vmem:[#allocation6 + $0x48] sm:$0xff]
          %v299 = vld [vmem:[#allocation6 + $0x50] sm:$0xff]
          %v300 = vld [vmem:[#allocation6 + $0x58] sm:$0xff]
          %v301 = vld [vmem:[#allocation6 + $0x60] sm:$0xff]
          %v302 = vld [vmem:[#allocation6 + $0x68] sm:$0xff]
          %v303 = vld [vmem:[#allocation6 + $0x70] sm:$0xff]
          %v304 = vld [vmem:[#allocation6 + $0x78] sm:$0xff]
          %v305 = vld [vmem:[%s2] sm:$0x1]
          %v307 = vperm.slane %v305, 0
          %309 = vmatpush.msra.mxu0 %v304
          %310 = vmatpush.msra.mxu0 %v303
          %311 = vmatpush.msra.mxu0 %v302
          %312 = vmatpush.msra.mxu0 %v301
          %313 = vmatpush.msra.mxu0 %v300
          %314 = vmatpush.msra.mxu0 %v299
          %315 = vmatpush.msra.mxu0 %v298
          %316 = vmatpush.msra.mxu0 %v297
          %317 = vmatpush.msra.mxu0 %v296
          %318 = vmatpush.msra.mxu0 %v295
          %319 = vmatpush.msra.mxu0 %v294
          %320 = vmatpush.msra.mxu0 %v293
          %321 = vmatpush.msra.mxu0 %v292
          %322 = vmatpush.msra.mxu0 %v291
          %323 = vmatpush.msra.mxu0 %v290
          %324 = vmatpush.msra.mxu0 %v289
          %325 = vmatmul.f32.gmra.mxu0 %v288
          %v326 = vpop.f32.mrf.mxu0
          %v327 = vadd.f32 %v307, %v326
          %328 = vdwg.mxu0
          %v329 = vmul.f32 %v327, %v327
          %330 = vadd.xlane.f32.xlu0 %v329
          %v331 = vpop.xlane.xlu0 %330
          %v332 = vadd.f32 %v331, 1e-12
          %v333 = vrsqrt.pop %v332
          %v334 = vmul.f32 %v333, %v332
          %v335 = vmul.f32 %v334, %v333
          %v336 = vmul.f32 0.5, %v335
          %v337 = vsub.f32 1.5, %v336
          %v338 = vmul.f32 %v333, %v337
          %vm339 = vweird.f32 %v332
          %vm340 = vweird.f32 %v333
          %vm341 = vmor %vm339, %vm340
          %v342 = vsel %vm341, %v333, %v338
          %v343 = vmul.f32 %v327, %v342
          %344 = vst [vmem:[#allocation2] sm:$0xff] %v343
        $region52: #{tpu_custom_call.1} parent=35 // pred_fallthru
          _
        %v345 = vld [vmem:[#allocation2] sm:$0xff]
        %v346 = vld [vmem:[%s253] sm:$0xff]
        %v347 = vld [vmem:[%s253 + $0x8] sm:$0xff]
        %v348 = vld [vmem:[%s253 + $0x10] sm:$0xff]
        %v349 = vld [vmem:[%s253 + $0x18] sm:$0xff]
        %v350 = vld [vmem:[%s253 + $0x20] sm:$0xff]
        %v351 = vld [vmem:[%s253 + $0x28] sm:$0xff]
        %v352 = vld [vmem:[%s253 + $0x30] sm:$0xff]
        %v353 = vld [vmem:[%s253 + $0x38] sm:$0xff]
        %v354 = vld [vmem:[%s253 + $0x40] sm:$0xff]
        %v355 = vld [vmem:[%s253 + $0x48] sm:$0xff]
        %v356 = vld [vmem:[%s253 + $0x50] sm:$0xff]
        %v357 = vld [vmem:[%s253 + $0x58] sm:$0xff]
        %v358 = vld [vmem:[%s253 + $0x60] sm:$0xff]
        %v359 = vld [vmem:[%s253 + $0x68] sm:$0xff]
        %v360 = vld [vmem:[%s253 + $0x70] sm:$0xff]
        %v361 = vld [vmem:[%s253 + $0x78] sm:$0xff]
        %362 = vmatpush.msra.mxu0 %v361
        %363 = vmatpush.msra.mxu0 %v360
        %364 = vmatpush.msra.mxu0 %v359
        %365 = vmatpush.msra.mxu0 %v358
        %366 = vmatpush.msra.mxu0 %v357
        %367 = vmatpush.msra.mxu0 %v356
        %368 = vmatpush.msra.mxu0 %v355
        %369 = vmatpush.msra.mxu0 %v354
        %370 = vmatpush.msra.mxu0 %v353
        %371 = vmatpush.msra.mxu0 %v352
        %372 = vmatpush.msra.mxu0 %v351
        %373 = vmatpush.msra.mxu0 %v350
        %374 = vmatpush.msra.mxu0 %v349
        %375 = vmatpush.msra.mxu0 %v348
        %376 = vmatpush.msra.mxu0 %v347
        %377 = vmatpush.msra.mxu0 %v346
        %378 = vmatmul.f32.gmra.mxu0 %v345
        %v379 = vpop.f32.mrf.mxu0
        %v380 = vadd.f32 0.0, %v379
        %381 = vdwg.mxu0
        %382 = vst [vmem:[%s283] sm:$0xff] %v380
        %s383 = sand.u32 %s138, 1
        %s384 = scalar_lea.sflag [#allocation5], %s383
        %s385 = sand.u32 %s138, 1
        %s386 = smul.addr %s385, 8
        %s387 = scalar_lea.vmem [#allocation9], %s386
        // Predicated region
        $region53: #{tpu_custom_call.1} parent=35 // pred_check
          %p388 = pneg %p148
        $region54: #{tpu_custom_call.1} parent=35 // pred_check_branch
          %390 = sbr.rel (%p388) target = $region56
        $region55: #{tpu_custom_call.1} parent=35 // pred_region
          %392 = vsyncadd %s384, 0
          %s393 = smul.addr %s26, 2
          %s394 = sadd.s32 %s27, %s393
          %s395 = smul.addr %s394, 8
          %s396 = scalar_lea.hbm %s4, %s395
          %s398 = sshll.u32 %s387, 4
          %s399 = int_to_ptr.vmem [resolvable:$true] %s398
          %s400 = sshll.u32 %s396, 4
          %s401 = int_to_ptr.hbm [resolvable:$true] %s400
          %403 = dma.vmem_to_hbm [thread:$0]  %s399, 128, %s401, %s384
        $region56: #{tpu_custom_call.1} parent=35 // pred_fallthru
          _
      $region36: #{tpu_custom_call.1} parent=5 // pred_fallthru
        _
      %p404 = scmp.le.s32.totalorder 2, %s17
      // Predicated region
      $region57: #{tpu_custom_call.1} parent=5 // pred_check
        %p405 = pneg %p404
      $region58: #{tpu_custom_call.1} parent=5 // pred_check_branch
        %407 = sbr.rel (%p405) target = $region60
      $region59: #{tpu_custom_call.1} parent=5 // pred_region
        %s408 = ssub.s32 %s17, 2
        // Predicated region
        $region61: #{tpu_custom_call.1} parent=59 // pred_check
          %p409 = pneg %p154
        $region62: #{tpu_custom_call.1} parent=59 // pred_check_branch
          %411 = sbr.rel (%p409) target = $region64
        $region63: #{tpu_custom_call.1} parent=59 // pred_region
          %s412 = sand.u32 %s139, 1
          %s413 = scalar_lea.sflag [#allocation5], %s412
          %s414 = sand.u32 %s139, 1
          %s415 = smul.addr %s414, 8
          %s416 = scalar_lea.vmem [#allocation9], %s415
          %418 = dma.done %s413, 128
        $region64: #{tpu_custom_call.1} parent=59 // pred_fallthru
          _
      $region60: #{tpu_custom_call.1} parent=5 // pred_fallthru
        _
    $region6: #{tpu_custom_call.1} parent=1 // loop_footer
      %s21 = sadd.s32 1, %s17
    $region7: #{tpu_custom_call.1} parent=1 // loop_footer_branch
      %16 = sbr.rel target = $region3
    $region8: #{tpu_custom_call.1} parent=1 // loop_exit
      _
    %419 = vsyncpa [#allocation4], 1
    %s420 = scalar_lea.sflag [#allocation4], 1
    %421 = vsyncpa %s420, 1
    %422 = vsyncpa [#allocation7], 1
    %423 = vsyncpa [#allocation5], 1
    %s424 = scalar_lea.sflag [#allocation5], 1
    %425 = vsyncpa %s424, 1

</llo_original>
